<compile_context>
chip_gen: v7x
topology: tpu7x:2x2x1
jax: 0.10.0
libtpu: 0.0.40
codegen_flags: <defaults>
</compile_context>

<pallas_src>
import functools

import jax
import jax.numpy as jnp
from jax import lax
from jax.experimental import pallas as pl
from jax.experimental.pallas import tpu as pltpu


def lstm_kernel(x_ref, wih_ref, whh_ref, b_ref, hn_ref, *,
                seq, batch, hidden, n_features):
    S, B, H, F = seq, batch, hidden, n_features

    x = x_ref[...]        # (S*B, F)
    wih = wih_ref[...]    # (F, 4H)
    whh = whh_ref[...]    # (H, 4H)   (W_hh^T)
    bias = b_ref[...]     # (1, 4H)

    # ---- Input projection for all timesteps at once -------------------------
    if F <= 32:
        # Tiny feature dim: VPU broadcast FMAs avoid a heavily padded MXU pass.
        gates = jnp.broadcast_to(bias, (S * B, 4 * H))
        for f in range(F):
            gates = gates + x[:, f:f + 1] * wih[f:f + 1, :]
    else:
        gates = jnp.dot(x, wih, preferred_element_type=jnp.float32) + bias

    # ---- Serial recurrence, fully unrolled, state carried in vregs ----------
    h = jnp.zeros((B, H), jnp.float32)
    c = jnp.zeros((B, H), jnp.float32)

    for t in range(S):
        gx = gates[t * B:(t + 1) * B, :]                    # static slice (B, 4H)
        if H == 1:
            # (B,1) * (1,4H) broadcast == outer product h @ W_hh^T; pure VPU.
            gh = h * whh
        else:
            gh = jnp.dot(h, whh, preferred_element_type=jnp.float32)
        g = gx + gh                                          # (B, 4H)

        # One sigmoid + one tanh over the whole gate vector, then lane-slices.
        sig = jax.nn.sigmoid(g)
        tnh = jnp.tanh(g)
        i_g = sig[:, 0 * H:1 * H]
        f_g = sig[:, 1 * H:2 * H]
        c_g = tnh[:, 2 * H:3 * H]
        o_g = sig[:, 3 * H:4 * H]

        c = f_g * c + i_g * c_g
        h = o_g * jnp.tanh(c)

    hn_ref[...] = h


def lstm_hn(x, w_ih, w_hh, b_ih, b_hh):
    """x: (S, B, F). Returns hn of shape (B, H) (== hn.view(-1, H) in PyTorch)."""
    S, B, F = x.shape
    H = w_hh.shape[1]                                  # w_hh: (4H, H)
    x_flat = x.reshape(S * B, F).astype(jnp.float32)
    wih_t = jnp.transpose(w_ih).astype(jnp.float32)    # (F, 4H)
    whh_t = jnp.transpose(w_hh).astype(jnp.float32)    # (H, 4H)
    bias = (b_ih + b_hh).reshape(1, 4 * H).astype(jnp.float32)

    kernel = functools.partial(lstm_kernel, seq=S, batch=B, hidden=H,
                               n_features=F)

    vmem = pl.BlockSpec(memory_space=pltpu.MemorySpace.VMEM)
    return pl.pallas_call(
        kernel,
        out_shape=jax.ShapeDtypeStruct((B, H), jnp.float32),
        in_specs=[vmem, vmem, vmem, vmem],
        out_specs=vmem,
    )(x_flat, wih_t, whh_t, bias)


def lstm_hn_ref(x, w_ih, w_hh, b_ih, b_hh):
    """Pure-JAX reference (lax.scan), PyTorch LSTM semantics."""
    S, B, F = x.shape
    H = w_hh.shape[1]
    bias = b_ih + b_hh

    def step(carry, xt):
        h, c = carry
        g = xt @ w_ih.T + h @ w_hh.T + bias             # (B, 4H)
        i_g = jax.nn.sigmoid(g[:, 0 * H:1 * H])
        f_g = jax.nn.sigmoid(g[:, 1 * H:2 * H])
        c_g = jnp.tanh(g[:, 2 * H:3 * H])
        o_g = jax.nn.sigmoid(g[:, 3 * H:4 * H])
        c_new = f_g * c + i_g * c_g
        h_new = o_g * jnp.tanh(c_new)
        return (h_new, c_new), None

    h0 = jnp.zeros((B, H), jnp.float32)
    c0 = jnp.zeros((B, H), jnp.float32)
    (hn, _), _ = lax.scan(step, (h0, c0), x)
    return hn


if __name__ == "__main__":
    SEQ, BATCH, N_FEATURES, HIDDEN = 8, 2, 4, 1

    key = jax.random.PRNGKey(0)
    kx, k1, k2, k3, k4 = jax.random.split(key, 5)

    # PyTorch LSTM init: U(-1/sqrt(H), 1/sqrt(H)); H=1 -> U(-1, 1).
    bound = 1.0 / (HIDDEN ** 0.5)
    x = jax.random.normal(kx, (SEQ, BATCH, N_FEATURES), jnp.float32)
    w_ih = jax.random.uniform(k1, (4 * HIDDEN, N_FEATURES), jnp.float32, -bound, bound)
    w_hh = jax.random.uniform(k2, (4 * HIDDEN, HIDDEN), jnp.float32, -bound, bound)
    b_ih = jax.random.uniform(k3, (4 * HIDDEN,), jnp.float32, -bound, bound)
    b_hh = jax.random.uniform(k4, (4 * HIDDEN,), jnp.float32, -bound, bound)

    hn = lstm_hn(x, w_ih, w_hh, b_ih, b_hh)
    jax.block_until_ready(hn)

    hn_ref = lstm_hn_ref(x, w_ih, w_hh, b_ih, b_hh)
    assert hn.shape == (BATCH, HIDDEN)
    assert jnp.allclose(hn, hn_ref, atol=1e-5, rtol=1e-5), (hn, hn_ref)

    print("KERNEL_OK")
</pallas_src>

<mosaic_0001>
module attributes {stable_mosaic.version = 11 : i64} {
  func.func @lstm_kernel(%arg0: memref<16x4xf32, #tpu.memory_space<vmem>>, %arg1: memref<4x4xf32, #tpu.memory_space<vmem>>, %arg2: memref<1x4xf32, #tpu.memory_space<vmem>>, %arg3: memref<1x4xf32, #tpu.memory_space<vmem>>, %arg4: memref<2x1xf32, #tpu.memory_space<vmem>>) attributes {dimension_semantics = [], scalar_prefetch = 0 : i64, scratch_operands = 0 : i64, tpu.core_type = #tpu.core_type<tc>} {
    %c0 = arith.constant 0 : index
    %c0_0 = arith.constant 0 : index
    %0 = vector.load %arg0[%c0, %c0_0] : memref<16x4xf32, #tpu.memory_space<vmem>>, vector<16x4xf32>
    %c0_1 = arith.constant 0 : index
    %c0_2 = arith.constant 0 : index
    %1 = vector.load %arg1[%c0_1, %c0_2] : memref<4x4xf32, #tpu.memory_space<vmem>>, vector<4x4xf32>
    %c0_3 = arith.constant 0 : index
    %c0_4 = arith.constant 0 : index
    %2 = vector.load %arg2[%c0_3, %c0_4] : memref<1x4xf32, #tpu.memory_space<vmem>>, vector<1x4xf32>
    %c0_5 = arith.constant 0 : index
    %c0_6 = arith.constant 0 : index
    %3 = vector.load %arg3[%c0_5, %c0_6] : memref<1x4xf32, #tpu.memory_space<vmem>>, vector<1x4xf32>
    %4 = vector.shape_cast %3 : vector<1x4xf32> to vector<1x4xf32>
    %5 = vector.broadcast %4 : vector<1x4xf32> to vector<16x4xf32>
    %6 = vector.extract_strided_slice %0 {offsets = [0, 0], sizes = [16, 1], strides = [1, 1]} : vector<16x4xf32> to vector<16x1xf32>
    %7 = vector.extract_strided_slice %1 {offsets = [0, 0], sizes = [1, 4], strides = [1, 1]} : vector<4x4xf32> to vector<1x4xf32>
    %8 = vector.broadcast %6 : vector<16x1xf32> to vector<16x4xf32>
    %9 = vector.broadcast %7 : vector<1x4xf32> to vector<16x4xf32>
    %10 = arith.mulf %8, %9 : vector<16x4xf32>
    %11 = arith.addf %5, %10 : vector<16x4xf32>
    %12 = vector.extract_strided_slice %0 {offsets = [0, 1], sizes = [16, 1], strides = [1, 1]} : vector<16x4xf32> to vector<16x1xf32>
    %13 = vector.extract_strided_slice %1 {offsets = [1, 0], sizes = [1, 4], strides = [1, 1]} : vector<4x4xf32> to vector<1x4xf32>
    %14 = vector.broadcast %12 : vector<16x1xf32> to vector<16x4xf32>
    %15 = vector.broadcast %13 : vector<1x4xf32> to vector<16x4xf32>
    %16 = arith.mulf %14, %15 : vector<16x4xf32>
    %17 = arith.addf %11, %16 : vector<16x4xf32>
    %18 = vector.extract_strided_slice %0 {offsets = [0, 2], sizes = [16, 1], strides = [1, 1]} : vector<16x4xf32> to vector<16x1xf32>
    %19 = vector.extract_strided_slice %1 {offsets = [2, 0], sizes = [1, 4], strides = [1, 1]} : vector<4x4xf32> to vector<1x4xf32>
    %20 = vector.broadcast %18 : vector<16x1xf32> to vector<16x4xf32>
    %21 = vector.broadcast %19 : vector<1x4xf32> to vector<16x4xf32>
    %22 = arith.mulf %20, %21 : vector<16x4xf32>
    %23 = arith.addf %17, %22 : vector<16x4xf32>
    %24 = vector.extract_strided_slice %0 {offsets = [0, 3], sizes = [16, 1], strides = [1, 1]} : vector<16x4xf32> to vector<16x1xf32>
    %25 = vector.extract_strided_slice %1 {offsets = [3, 0], sizes = [1, 4], strides = [1, 1]} : vector<4x4xf32> to vector<1x4xf32>
    %26 = vector.broadcast %24 : vector<16x1xf32> to vector<16x4xf32>
    %27 = vector.broadcast %25 : vector<1x4xf32> to vector<16x4xf32>
    %28 = arith.mulf %26, %27 : vector<16x4xf32>
    %29 = arith.addf %23, %28 : vector<16x4xf32>
    %cst = arith.constant 0.000000e+00 : f32
    %30 = vector.broadcast %cst : f32 to vector<2x1xf32>
    %cst_7 = arith.constant 0.000000e+00 : f32
    %31 = vector.broadcast %cst_7 : f32 to vector<2x1xf32>
    %32 = vector.extract_strided_slice %29 {offsets = [0, 0], sizes = [2, 4], strides = [1, 1]} : vector<16x4xf32> to vector<2x4xf32>
    %33 = vector.broadcast %30 : vector<2x1xf32> to vector<2x4xf32>
    %34 = vector.broadcast %2 : vector<1x4xf32> to vector<2x4xf32>
    %35 = arith.mulf %33, %34 : vector<2x4xf32>
    %36 = arith.addf %32, %35 : vector<2x4xf32>
    %37 = arith.negf %36 : vector<2x4xf32>
    %38 = math.exp %37 : vector<2x4xf32>
    %cst_8 = arith.constant 1.000000e+00 : f32
    %39 = vector.broadcast %cst_8 : f32 to vector<2x4xf32>
    %40 = arith.addf %39, %38 : vector<2x4xf32>
    %41 = arith.divf %39, %40 : vector<2x4xf32>
    %42 = math.tanh %36 : vector<2x4xf32>
    %43 = vector.extract_strided_slice %41 {offsets = [0, 0], sizes = [2, 1], strides = [1, 1]} : vector<2x4xf32> to vector<2x1xf32>
    %44 = vector.extract_strided_slice %41 {offsets = [0, 1], sizes = [2, 1], strides = [1, 1]} : vector<2x4xf32> to vector<2x1xf32>
    %45 = vector.extract_strided_slice %42 {offsets = [0, 2], sizes = [2, 1], strides = [1, 1]} : vector<2x4xf32> to vector<2x1xf32>
    %46 = vector.extract_strided_slice %41 {offsets = [0, 3], sizes = [2, 1], strides = [1, 1]} : vector<2x4xf32> to vector<2x1xf32>
    %47 = arith.mulf %44, %31 : vector<2x1xf32>
    %48 = arith.mulf %43, %45 : vector<2x1xf32>
    %49 = arith.addf %47, %48 : vector<2x1xf32>
    %50 = math.tanh %49 : vector<2x1xf32>
    %51 = arith.mulf %46, %50 : vector<2x1xf32>
    %52 = vector.extract_strided_slice %29 {offsets = [2, 0], sizes = [2, 4], strides = [1, 1]} : vector<16x4xf32> to vector<2x4xf32>
    %53 = vector.broadcast %51 : vector<2x1xf32> to vector<2x4xf32>
    %54 = vector.broadcast %2 : vector<1x4xf32> to vector<2x4xf32>
    %55 = arith.mulf %53, %54 : vector<2x4xf32>
    %56 = arith.addf %52, %55 : vector<2x4xf32>
    %57 = arith.negf %56 : vector<2x4xf32>
    %58 = math.exp %57 : vector<2x4xf32>
    %cst_9 = arith.constant 1.000000e+00 : f32
    %59 = vector.broadcast %cst_9 : f32 to vector<2x4xf32>
    %60 = arith.addf %59, %58 : vector<2x4xf32>
    %61 = arith.divf %59, %60 : vector<2x4xf32>
    %62 = math.tanh %56 : vector<2x4xf32>
    %63 = vector.extract_strided_slice %61 {offsets = [0, 0], sizes = [2, 1], strides = [1, 1]} : vector<2x4xf32> to vector<2x1xf32>
    %64 = vector.extract_strided_slice %61 {offsets = [0, 1], sizes = [2, 1], strides = [1, 1]} : vector<2x4xf32> to vector<2x1xf32>
    %65 = vector.extract_strided_slice %62 {offsets = [0, 2], sizes = [2, 1], strides = [1, 1]} : vector<2x4xf32> to vector<2x1xf32>
    %66 = vector.extract_strided_slice %61 {offsets = [0, 3], sizes = [2, 1], strides = [1, 1]} : vector<2x4xf32> to vector<2x1xf32>
    %67 = arith.mulf %64, %49 : vector<2x1xf32>
    %68 = arith.mulf %63, %65 : vector<2x1xf32>
    %69 = arith.addf %67, %68 : vector<2x1xf32>
    %70 = math.tanh %69 : vector<2x1xf32>
    %71 = arith.mulf %66, %70 : vector<2x1xf32>
    %72 = vector.extract_strided_slice %29 {offsets = [4, 0], sizes = [2, 4], strides = [1, 1]} : vector<16x4xf32> to vector<2x4xf32>
    %73 = vector.broadcast %71 : vector<2x1xf32> to vector<2x4xf32>
    %74 = vector.broadcast %2 : vector<1x4xf32> to vector<2x4xf32>
    %75 = arith.mulf %73, %74 : vector<2x4xf32>
    %76 = arith.addf %72, %75 : vector<2x4xf32>
    %77 = arith.negf %76 : vector<2x4xf32>
    %78 = math.exp %77 : vector<2x4xf32>
    %cst_10 = arith.constant 1.000000e+00 : f32
    %79 = vector.broadcast %cst_10 : f32 to vector<2x4xf32>
    %80 = arith.addf %79, %78 : vector<2x4xf32>
    %81 = arith.divf %79, %80 : vector<2x4xf32>
    %82 = math.tanh %76 : vector<2x4xf32>
    %83 = vector.extract_strided_slice %81 {offsets = [0, 0], sizes = [2, 1], strides = [1, 1]} : vector<2x4xf32> to vector<2x1xf32>
    %84 = vector.extract_strided_slice %81 {offsets = [0, 1], sizes = [2, 1], strides = [1, 1]} : vector<2x4xf32> to vector<2x1xf32>
    %85 = vector.extract_strided_slice %82 {offsets = [0, 2], sizes = [2, 1], strides = [1, 1]} : vector<2x4xf32> to vector<2x1xf32>
    %86 = vector.extract_strided_slice %81 {offsets = [0, 3], sizes = [2, 1], strides = [1, 1]} : vector<2x4xf32> to vector<2x1xf32>
    %87 = arith.mulf %84, %69 : vector<2x1xf32>
    %88 = arith.mulf %83, %85 : vector<2x1xf32>
    %89 = arith.addf %87, %88 : vector<2x1xf32>
    %90 = math.tanh %89 : vector<2x1xf32>
    %91 = arith.mulf %86, %90 : vector<2x1xf32>
    %92 = vector.extract_strided_slice %29 {offsets = [6, 0], sizes = [2, 4], strides = [1, 1]} : vector<16x4xf32> to vector<2x4xf32>
    %93 = vector.broadcast %91 : vector<2x1xf32> to vector<2x4xf32>
    %94 = vector.broadcast %2 : vector<1x4xf32> to vector<2x4xf32>
    %95 = arith.mulf %93, %94 : vector<2x4xf32>
    %96 = arith.addf %92, %95 : vector<2x4xf32>
    %97 = arith.negf %96 : vector<2x4xf32>
    %98 = math.exp %97 : vector<2x4xf32>
    %cst_11 = arith.constant 1.000000e+00 : f32
    %99 = vector.broadcast %cst_11 : f32 to vector<2x4xf32>
    %100 = arith.addf %99, %98 : vector<2x4xf32>
    %101 = arith.divf %99, %100 : vector<2x4xf32>
    %102 = math.tanh %96 : vector<2x4xf32>
    %103 = vector.extract_strided_slice %101 {offsets = [0, 0], sizes = [2, 1], strides = [1, 1]} : vector<2x4xf32> to vector<2x1xf32>
    %104 = vector.extract_strided_slice %101 {offsets = [0, 1], sizes = [2, 1], strides = [1, 1]} : vector<2x4xf32> to vector<2x1xf32>
    %105 = vector.extract_strided_slice %102 {offsets = [0, 2], sizes = [2, 1], strides = [1, 1]} : vector<2x4xf32> to vector<2x1xf32>
    %106 = vector.extract_strided_slice %101 {offsets = [0, 3], sizes = [2, 1], strides = [1, 1]} : vector<2x4xf32> to vector<2x1xf32>
    %107 = arith.mulf %104, %89 : vector<2x1xf32>
    %108 = arith.mulf %103, %105 : vector<2x1xf32>
    %109 = arith.addf %107, %108 : vector<2x1xf32>
    %110 = math.tanh %109 : vector<2x1xf32>
    %111 = arith.mulf %106, %110 : vector<2x1xf32>
    %112 = vector.extract_strided_slice %29 {offsets = [8, 0], sizes = [2, 4], strides = [1, 1]} : vector<16x4xf32> to vector<2x4xf32>
    %113 = vector.broadcast %111 : vector<2x1xf32> to vector<2x4xf32>
    %114 = vector.broadcast %2 : vector<1x4xf32> to vector<2x4xf32>
    %115 = arith.mulf %113, %114 : vector<2x4xf32>
    %116 = arith.addf %112, %115 : vector<2x4xf32>
    %117 = arith.negf %116 : vector<2x4xf32>
    %118 = math.exp %117 : vector<2x4xf32>
    %cst_12 = arith.constant 1.000000e+00 : f32
    %119 = vector.broadcast %cst_12 : f32 to vector<2x4xf32>
    %120 = arith.addf %119, %118 : vector<2x4xf32>
    %121 = arith.divf %119, %120 : vector<2x4xf32>
    %122 = math.tanh %116 : vector<2x4xf32>
    %123 = vector.extract_strided_slice %121 {offsets = [0, 0], sizes = [2, 1], strides = [1, 1]} : vector<2x4xf32> to vector<2x1xf32>
    %124 = vector.extract_strided_slice %121 {offsets = [0, 1], sizes = [2, 1], strides = [1, 1]} : vector<2x4xf32> to vector<2x1xf32>
    %125 = vector.extract_strided_slice %122 {offsets = [0, 2], sizes = [2, 1], strides = [1, 1]} : vector<2x4xf32> to vector<2x1xf32>
    %126 = vector.extract_strided_slice %121 {offsets = [0, 3], sizes = [2, 1], strides = [1, 1]} : vector<2x4xf32> to vector<2x1xf32>
    %127 = arith.mulf %124, %109 : vector<2x1xf32>
    %128 = arith.mulf %123, %125 : vector<2x1xf32>
    %129 = arith.addf %127, %128 : vector<2x1xf32>
    %130 = math.tanh %129 : vector<2x1xf32>
    %131 = arith.mulf %126, %130 : vector<2x1xf32>
    %132 = vector.extract_strided_slice %29 {offsets = [10, 0], sizes = [2, 4], strides = [1, 1]} : vector<16x4xf32> to vector<2x4xf32>
    %133 = vector.broadcast %131 : vector<2x1xf32> to vector<2x4xf32>
    %134 = vector.broadcast %2 : vector<1x4xf32> to vector<2x4xf32>
    %135 = arith.mulf %133, %134 : vector<2x4xf32>
    %136 = arith.addf %132, %135 : vector<2x4xf32>
    %137 = arith.negf %136 : vector<2x4xf32>
    %138 = math.exp %137 : vector<2x4xf32>
    %cst_13 = arith.constant 1.000000e+00 : f32
    %139 = vector.broadcast %cst_13 : f32 to vector<2x4xf32>
    %140 = arith.addf %139, %138 : vector<2x4xf32>
    %141 = arith.divf %139, %140 : vector<2x4xf32>
    %142 = math.tanh %136 : vector<2x4xf32>
    %143 = vector.extract_strided_slice %141 {offsets = [0, 0], sizes = [2, 1], strides = [1, 1]} : vector<2x4xf32> to vector<2x1xf32>
    %144 = vector.extract_strided_slice %141 {offsets = [0, 1], sizes = [2, 1], strides = [1, 1]} : vector<2x4xf32> to vector<2x1xf32>
    %145 = vector.extract_strided_slice %142 {offsets = [0, 2], sizes = [2, 1], strides = [1, 1]} : vector<2x4xf32> to vector<2x1xf32>
    %146 = vector.extract_strided_slice %141 {offsets = [0, 3], sizes = [2, 1], strides = [1, 1]} : vector<2x4xf32> to vector<2x1xf32>
    %147 = arith.mulf %144, %129 : vector<2x1xf32>
    %148 = arith.mulf %143, %145 : vector<2x1xf32>
    %149 = arith.addf %147, %148 : vector<2x1xf32>
    %150 = math.tanh %149 : vector<2x1xf32>
    %151 = arith.mulf %146, %150 : vector<2x1xf32>
    %152 = vector.extract_strided_slice %29 {offsets = [12, 0], sizes = [2, 4], strides = [1, 1]} : vector<16x4xf32> to vector<2x4xf32>
    %153 = vector.broadcast %151 : vector<2x1xf32> to vector<2x4xf32>
    %154 = vector.broadcast %2 : vector<1x4xf32> to vector<2x4xf32>
    %155 = arith.mulf %153, %154 : vector<2x4xf32>
    %156 = arith.addf %152, %155 : vector<2x4xf32>
    %157 = arith.negf %156 : vector<2x4xf32>
    %158 = math.exp %157 : vector<2x4xf32>
    %cst_14 = arith.constant 1.000000e+00 : f32
    %159 = vector.broadcast %cst_14 : f32 to vector<2x4xf32>
    %160 = arith.addf %159, %158 : vector<2x4xf32>
    %161 = arith.divf %159, %160 : vector<2x4xf32>
    %162 = math.tanh %156 : vector<2x4xf32>
    %163 = vector.extract_strided_slice %161 {offsets = [0, 0], sizes = [2, 1], strides = [1, 1]} : vector<2x4xf32> to vector<2x1xf32>
    %164 = vector.extract_strided_slice %161 {offsets = [0, 1], sizes = [2, 1], strides = [1, 1]} : vector<2x4xf32> to vector<2x1xf32>
    %165 = vector.extract_strided_slice %162 {offsets = [0, 2], sizes = [2, 1], strides = [1, 1]} : vector<2x4xf32> to vector<2x1xf32>
    %166 = vector.extract_strided_slice %161 {offsets = [0, 3], sizes = [2, 1], strides = [1, 1]} : vector<2x4xf32> to vector<2x1xf32>
    %167 = arith.mulf %164, %149 : vector<2x1xf32>
    %168 = arith.mulf %163, %165 : vector<2x1xf32>
    %169 = arith.addf %167, %168 : vector<2x1xf32>
    %170 = math.tanh %169 : vector<2x1xf32>
    %171 = arith.mulf %166, %170 : vector<2x1xf32>
    %172 = vector.extract_strided_slice %29 {offsets = [14, 0], sizes = [2, 4], strides = [1, 1]} : vector<16x4xf32> to vector<2x4xf32>
    %173 = vector.broadcast %171 : vector<2x1xf32> to vector<2x4xf32>
    %174 = vector.broadcast %2 : vector<1x4xf32> to vector<2x4xf32>
    %175 = arith.mulf %173, %174 : vector<2x4xf32>
    %176 = arith.addf %172, %175 : vector<2x4xf32>
    %177 = arith.negf %176 : vector<2x4xf32>
    %178 = math.exp %177 : vector<2x4xf32>
    %cst_15 = arith.constant 1.000000e+00 : f32
    %179 = vector.broadcast %cst_15 : f32 to vector<2x4xf32>
    %180 = arith.addf %179, %178 : vector<2x4xf32>
    %181 = arith.divf %179, %180 : vector<2x4xf32>
    %182 = math.tanh %176 : vector<2x4xf32>
    %183 = vector.extract_strided_slice %181 {offsets = [0, 0], sizes = [2, 1], strides = [1, 1]} : vector<2x4xf32> to vector<2x1xf32>
    %184 = vector.extract_strided_slice %181 {offsets = [0, 1], sizes = [2, 1], strides = [1, 1]} : vector<2x4xf32> to vector<2x1xf32>
    %185 = vector.extract_strided_slice %182 {offsets = [0, 2], sizes = [2, 1], strides = [1, 1]} : vector<2x4xf32> to vector<2x1xf32>
    %186 = vector.extract_strided_slice %181 {offsets = [0, 3], sizes = [2, 1], strides = [1, 1]} : vector<2x4xf32> to vector<2x1xf32>
    %187 = arith.mulf %184, %169 : vector<2x1xf32>
    %188 = arith.mulf %183, %185 : vector<2x1xf32>
    %189 = arith.addf %187, %188 : vector<2x1xf32>
    %190 = math.tanh %189 : vector<2x1xf32>
    %191 = arith.mulf %186, %190 : vector<2x1xf32>
    %c0_16 = arith.constant 0 : index
    %c0_17 = arith.constant 0 : index
    %192 = vector.load %arg4[%c0_16, %c0_17] : memref<2x1xf32, #tpu.memory_space<vmem>>, vector<2x1xf32>
    tpu.vector_store %arg4[%c0_16, %c0_17], %191 {strides = array<i32>} : memref<2x1xf32, #tpu.memory_space<vmem>>, vector<2x1xf32>,
    return
  }
}

</mosaic_0001>

<llo_original>
// kernel: tpu_custom_call.1
$region0: #{tpu_custom_call.1}
  #allocation0 [shape = 'u32[]', space=smem, size = 0x4, offset = 0x4, fixed_abs, tag = 'smem constant byte address 0x4 - core index']
  #allocation1 [shape = 'u32[144,128]{1,0:T(1,128)}', space=vmem, size = 0x12000, scoped, tag = 'internal scratch']
  %s0 = inlined_call_operand.vmem [shape: f32[16,4], index: 0, kind: input, shape index: {}]
  %s1 = inlined_call_operand.vmem [shape: f32[4,4], index: 1, kind: input, shape index: {}]
  %s2 = inlined_call_operand.vmem [shape: f32[1,4], index: 2, kind: input, shape index: {}]
  %s3 = inlined_call_operand.vmem [shape: f32[1,4], index: 3, kind: input, shape index: {}]
  %s4 = inlined_call_operand.vmem [shape: f32[2,1], index: 4, kind: output, shape index: {}]
  %s5 = sld [smem:[#allocation0]]
  $region26: #{tpu_custom_call.1} parent=0
    _
  %s7 = ssub.s32 1, %s5
  %s8 = scalar_select 0, %s7, %s5
  // Predicated region
  $region2: #{tpu_custom_call.1} parent=0 // pred_check
    _
  $region3: #{tpu_custom_call.1} parent=0 // pred_check_branch
    %10 = sbr.rel (0) target = $region5
  $region4: #{tpu_custom_call.1} parent=0 // pred_region
    _
  $region5: #{tpu_custom_call.1} parent=0 // pred_fallthru
    _
  // Predicated region
  $region6: #{tpu_custom_call.1} parent=0 // pred_check
    _
  $region7: #{tpu_custom_call.1} parent=0 // pred_check_branch
    %12 = sbr.rel (0) target = $region9
  $region8: #{tpu_custom_call.1} parent=0 // pred_region
    _
  $region9: #{tpu_custom_call.1} parent=0 // pred_fallthru
    _
  // Predicated region
  $region10: #{tpu_custom_call.1} parent=0 // pred_check
    _
  $region11: #{tpu_custom_call.1} parent=0 // pred_check_branch
    %14 = sbr.rel (0) target = $region13
  $region12: #{tpu_custom_call.1} parent=0 // pred_region
    _
  $region13: #{tpu_custom_call.1} parent=0 // pred_fallthru
    _
  // Predicated region
  $region14: #{tpu_custom_call.1} parent=0 // pred_check
    _
  $region15: #{tpu_custom_call.1} parent=0 // pred_check_branch
    %16 = sbr.rel (0) target = $region17
  $region16: #{tpu_custom_call.1} parent=0 // pred_region
    _
  $region17: #{tpu_custom_call.1} parent=0 // pred_fallthru
    _
  %v17 = vld [vmem:[%s0] sm:$0xff]
  %v18 = vld [vmem:[%s0 + $0x8] sm:$0xff]
  %v19 = vld [vmem:[%s1] sm:$0xf]
  %v20 = vld [vmem:[%s2] sm:$0x1]
  %v21 = vld [vmem:[%s3] sm:$0x1]
  %v23 = vlaneseq
  %v24 = vshrl.u32 %v23, 7
  %v25 = vsub.s32 0, %v24
  %v26 = vrot.slane %v21, %v25
  %29 = vset.pattern.permute.xlu0 0
  %30 = vperm.xlu0 %29, %v17
  %v31 = vpop.permute.xlu0 %30
  %34 = vset.pattern.permute.xlu0 0
  %35 = vperm.xlu0 %34, %v18
  %v36 = vpop.permute.xlu0 %35
  %v38 = vlaneseq
  %v39 = vshrl.u32 %v38, 7
  %v40 = vsub.s32 0, %v39
  %v41 = vrot.slane %v19, %v40
  %v42 = vmul.f32 %v31, %v41
  %v43 = vmul.f32 %v36, %v41
  %v44 = vadd.f32 %v26, %v42
  %v45 = vadd.f32 %v26, %v43
  %46 = vset.pattern.permute.xlu0 1
  %47 = vperm.xlu0 %46, %v17
  %v48 = vpop.permute.xlu0 %47
  %50 = vset.pattern.permute.xlu0 1
  %51 = vperm.xlu0 %50, %v18
  %v52 = vpop.permute.xlu0 %51
  %v54 = vlaneseq
  %v55 = vshrl.u32 %v54, 7
  %v56 = vsub.s32 1, %v55
  %v57 = vrot.slane %v19, %v56
  %v58 = vmul.f32 %v48, %v57
  %v59 = vmul.f32 %v52, %v57
  %v60 = vadd.f32 %v44, %v58
  %v61 = vadd.f32 %v45, %v59
  %62 = vset.pattern.permute.xlu0 2
  %63 = vperm.xlu0 %62, %v17
  %v64 = vpop.permute.xlu0 %63
  %66 = vset.pattern.permute.xlu0 2
  %67 = vperm.xlu0 %66, %v18
  %v68 = vpop.permute.xlu0 %67
  %v70 = vlaneseq
  %v71 = vshrl.u32 %v70, 7
  %v72 = vsub.s32 2, %v71
  %v73 = vrot.slane %v19, %v72
  %v74 = vmul.f32 %v64, %v73
  %v75 = vmul.f32 %v68, %v73
  %v76 = vadd.f32 %v60, %v74
  %v77 = vadd.f32 %v61, %v75
  %78 = vset.pattern.permute.xlu0 3
  %79 = vperm.xlu0 %78, %v17
  %v80 = vpop.permute.xlu0 %79
  %82 = vset.pattern.permute.xlu0 3
  %83 = vperm.xlu0 %82, %v18
  %v84 = vpop.permute.xlu0 %83
  %v86 = vlaneseq
  %v87 = vshrl.u32 %v86, 7
  %v88 = vsub.s32 3, %v87
  %v89 = vrot.slane %v19, %v88
  %v90 = vmul.f32 %v80, %v89
  %v91 = vmul.f32 %v84, %v89
  %v92 = vadd.f32 %v76, %v90
  %v93 = vadd.f32 %v77, %v91
  %v95 = vlaneseq
  %v96 = vshrl.u32 %v95, 7
  %v97 = vsub.s32 0, %v96
  %v98 = vrot.slane %v20, %v97
  %v100 = vmul.f32 %v98, 0.0
  %v101 = vadd.f32 %v92, %v100
  %v102 = vxor.u32 %v101, 2147483648
  %v103 = vmul.f32 %v102, 1.442695
  %v104 = vpow.pop %v103
  %v105 = vadd.f32 %v104, 1.0
  %v106 = vrcp.pop %v105
  %v107 = vmul.f32 1.0, %v106
  %v108 = vtanh.pop %v101
  %v109 = vmul.f32 %v107, 0.0
  %111 = vrot.lane.b32.xlu0 %v108, 126
  %v112 = vpop.permute.xlu0 %111
  %v114 = vmul.f32 %v107, %v112
  %116 = vrot.lane.b32.xlu0 %v114, 1
  %v117 = vpop.permute.xlu0 %116
  %v119 = vadd.f32 %v109, %v117
  %v120 = vtanh.pop %v119
  %122 = vrot.lane.b32.xlu0 %v120, 2
  %v123 = vpop.permute.xlu0 %122
  %v125 = vmul.f32 %v107, %v123
  %127 = vset.pattern.permute.xlu0 3
  %128 = vperm.xlu0 %127, %v125
  %v129 = vpop.permute.xlu0 %128
  %v131 = vmul.f32 %v129, %v98
  %v133 = vrot.slane %v131, 6
  %v135 = vadd.f32 %v92, %v133
  %v136 = vxor.u32 %v135, 2147483648
  %v137 = vmul.f32 %v136, 1.442695
  %v138 = vpow.pop %v137
  %v139 = vadd.f32 %v138, 1.0
  %v140 = vrcp.pop %v139
  %v141 = vmul.f32 1.0, %v140
  %v142 = vtanh.pop %v135
  %v144 = vrot.slane %v119, 6
  %v146 = vmul.f32 %v141, %v144
  %148 = vrot.lane.b32.xlu0 %v142, 126
  %v149 = vpop.permute.xlu0 %148
  %v151 = vmul.f32 %v141, %v149
  %153 = vrot.lane.b32.xlu0 %v151, 1
  %v154 = vpop.permute.xlu0 %153
  %v156 = vadd.f32 %v146, %v154
  %v157 = vtanh.pop %v156
  %159 = vrot.lane.b32.xlu0 %v157, 2
  %v160 = vpop.permute.xlu0 %159
  %v162 = vmul.f32 %v141, %v160
  %164 = vset.pattern.permute.xlu0 3
  %165 = vperm.xlu0 %164, %v162
  %v166 = vpop.permute.xlu0 %165
  %v168 = vmul.f32 %v166, %v98
  %v170 = vrot.slane %v168, 6
  %v172 = vadd.f32 %v92, %v170
  %v173 = vxor.u32 %v172, 2147483648
  %v174 = vmul.f32 %v173, 1.442695
  %v175 = vpow.pop %v174
  %v176 = vadd.f32 %v175, 1.0
  %v177 = vrcp.pop %v176
  %v178 = vmul.f32 1.0, %v177
  %v179 = vtanh.pop %v172
  %v181 = vrot.slane %v156, 6
  %v183 = vmul.f32 %v178, %v181
  %185 = vrot.lane.b32.xlu0 %v179, 126
  %v186 = vpop.permute.xlu0 %185
  %v188 = vmul.f32 %v178, %v186
  %190 = vrot.lane.b32.xlu0 %v188, 1
  %v191 = vpop.permute.xlu0 %190
  %v193 = vadd.f32 %v183, %v191
  %v194 = vtanh.pop %v193
  %196 = vrot.lane.b32.xlu0 %v194, 2
  %v197 = vpop.permute.xlu0 %196
  %v199 = vmul.f32 %v178, %v197
  %201 = vset.pattern.permute.xlu0 3
  %202 = vperm.xlu0 %201, %v199
  %v203 = vpop.permute.xlu0 %202
  %v205 = vmul.f32 %v203, %v98
  %v207 = vrot.slane %v205, 6
  %v209 = vadd.f32 %v92, %v207
  %v210 = vxor.u32 %v209, 2147483648
  %v211 = vmul.f32 %v210, 1.442695
  %v212 = vpow.pop %v211
  %v213 = vadd.f32 %v212, 1.0
  %v214 = vrcp.pop %v213
  %v215 = vmul.f32 1.0, %v214
  %v216 = vtanh.pop %v209
  %v218 = vrot.slane %v193, 6
  %v220 = vmul.f32 %v215, %v218
  %222 = vrot.lane.b32.xlu0 %v216, 126
  %v223 = vpop.permute.xlu0 %222
  %v225 = vmul.f32 %v215, %v223
  %227 = vrot.lane.b32.xlu0 %v225, 1
  %v228 = vpop.permute.xlu0 %227
  %v230 = vadd.f32 %v220, %v228
  %v231 = vtanh.pop %v230
  %233 = vrot.lane.b32.xlu0 %v231, 2
  %v234 = vpop.permute.xlu0 %233
  %v236 = vmul.f32 %v215, %v234
  %238 = vset.pattern.permute.xlu0 3
  %239 = vperm.xlu0 %238, %v236
  %v240 = vpop.permute.xlu0 %239
  %v242 = vmul.f32 %v240, %v98
  %v244 = vrot.slane %v242, 6
  %v246 = vadd.f32 %v93, %v244
  %v247 = vxor.u32 %v246, 2147483648
  %v248 = vmul.f32 %v247, 1.442695
  %v249 = vpow.pop %v248
  %v250 = vadd.f32 %v249, 1.0
  %v251 = vrcp.pop %v250
  %v252 = vmul.f32 1.0, %v251
  %v253 = vtanh.pop %v246
  %v255 = vrot.slane %v230, 6
  %v257 = vmul.f32 %v252, %v255
  %259 = vrot.lane.b32.xlu0 %v253, 126
  %v260 = vpop.permute.xlu0 %259
  %v262 = vmul.f32 %v252, %v260
  %264 = vrot.lane.b32.xlu0 %v262, 1
  %v265 = vpop.permute.xlu0 %264
  %v267 = vadd.f32 %v257, %v265
  %v268 = vtanh.pop %v267
  %270 = vrot.lane.b32.xlu0 %v268, 2
  %v271 = vpop.permute.xlu0 %270
  %v273 = vmul.f32 %v252, %v271
  %275 = vset.pattern.permute.xlu0 3
  %276 = vperm.xlu0 %275, %v273
  %v277 = vpop.permute.xlu0 %276
  %v279 = vmul.f32 %v277, %v98
  %v281 = vrot.slane %v279, 6
  %v283 = vadd.f32 %v93, %v281
  %v284 = vxor.u32 %v283, 2147483648
  %v285 = vmul.f32 %v284, 1.442695
  %v286 = vpow.pop %v285
  %v287 = vadd.f32 %v286, 1.0
  %v288 = vrcp.pop %v287
  %v289 = vmul.f32 1.0, %v288
  %v290 = vtanh.pop %v283
  %v292 = vrot.slane %v267, 6
  %v294 = vmul.f32 %v289, %v292
  %296 = vrot.lane.b32.xlu0 %v290, 126
  %v297 = vpop.permute.xlu0 %296
  %v299 = vmul.f32 %v289, %v297
  %301 = vrot.lane.b32.xlu0 %v299, 1
  %v302 = vpop.permute.xlu0 %301
  %v304 = vadd.f32 %v294, %v302
  %v305 = vtanh.pop %v304
  %307 = vrot.lane.b32.xlu0 %v305, 2
  %v308 = vpop.permute.xlu0 %307
  %v310 = vmul.f32 %v289, %v308
  %312 = vset.pattern.permute.xlu0 3
  %313 = vperm.xlu0 %312, %v310
  %v314 = vpop.permute.xlu0 %313
  %v316 = vmul.f32 %v314, %v98
  %v318 = vrot.slane %v316, 6
  %v320 = vadd.f32 %v93, %v318
  %v321 = vxor.u32 %v320, 2147483648
  %v322 = vmul.f32 %v321, 1.442695
  %v323 = vpow.pop %v322
  %v324 = vadd.f32 %v323, 1.0
  %v325 = vrcp.pop %v324
  %v326 = vmul.f32 1.0, %v325
  %v327 = vtanh.pop %v320
  %v329 = vrot.slane %v304, 6
  %v331 = vmul.f32 %v326, %v329
  %333 = vrot.lane.b32.xlu0 %v327, 126
  %v334 = vpop.permute.xlu0 %333
  %v336 = vmul.f32 %v326, %v334
  %338 = vrot.lane.b32.xlu0 %v336, 1
  %v339 = vpop.permute.xlu0 %338
  %v341 = vadd.f32 %v331, %v339
  %v342 = vtanh.pop %v341
  %344 = vrot.lane.b32.xlu0 %v342, 2
  %v345 = vpop.permute.xlu0 %344
  %v347 = vmul.f32 %v326, %v345
  %349 = vset.pattern.permute.xlu0 3
  %350 = vperm.xlu0 %349, %v347
  %v351 = vpop.permute.xlu0 %350
  %v353 = vmul.f32 %v351, %v98
  %v355 = vrot.slane %v353, 6
  %v357 = vadd.f32 %v93, %v355
  %v358 = vxor.u32 %v357, 2147483648
  %v359 = vmul.f32 %v358, 1.442695
  %v360 = vpow.pop %v359
  %v361 = vadd.f32 %v360, 1.0
  %v362 = vrcp.pop %v361
  %v363 = vmul.f32 1.0, %v362
  %v364 = vtanh.pop %v357
  %v366 = vrot.slane %v341, 6
  %v368 = vmul.f32 %v363, %v366
  %370 = vrot.lane.b32.xlu0 %v364, 126
  %v371 = vpop.permute.xlu0 %370
  %v373 = vmul.f32 %v363, %v371
  %375 = vrot.lane.b32.xlu0 %v373, 1
  %v376 = vpop.permute.xlu0 %375
  %v378 = vadd.f32 %v368, %v376
  %v379 = vtanh.pop %v378
  %381 = vrot.lane.b32.xlu0 %v379, 2
  %v382 = vpop.permute.xlu0 %381
  %v384 = vmul.f32 %v363, %v382
  %386 = vrot.lane.b32.xlu0 %v384, 125
  %v387 = vpop.permute.xlu0 %386
  %vm389 = vcmask 7174
  %390 = vst.msk [vmem:[%s4 - $0x6] sm:$0xc0] %vm389, %v387
  // Predicated region
  $region18: #{tpu_custom_call.1} parent=0 // pred_check
    _
  $region19: #{tpu_custom_call.1} parent=0 // pred_check_branch
    %392 = sbr.rel (0) target = $region21
  $region20: #{tpu_custom_call.1} parent=0 // pred_region
    _
  $region21: #{tpu_custom_call.1} parent=0 // pred_fallthru
    _
  // Predicated region
  $region22: #{tpu_custom_call.1} parent=0 // pred_check
    _
  $region23: #{tpu_custom_call.1} parent=0 // pred_check_branch
    %394 = sbr.rel (0) target = $region25
  $region24: #{tpu_custom_call.1} parent=0 // pred_region
    _
  $region25: #{tpu_custom_call.1} parent=0 // pred_fallthru
    _

</llo_original>
